<compile_context>
chip_gen: v6e
topology: v6e:2x2x1
jax: 0.10.0
libtpu: 0.0.40
codegen_flags: <defaults>
</compile_context>

<pallas_src>
import jax
import jax.numpy as jnp
from jax.experimental import pallas as pl
from jax.experimental.pallas import tpu as pltpu

_LANE = 128


def _normalize_kernel(x_ref, scale_ref, bias_ref, o_ref):
    # x_ref:     (tr, tc) lane-dense tile of the flattened image
    # scale_ref: (tr, 1) f32 per-row scale (= 1/std of the row's channel)
    # bias_ref:  (tr, 1) f32 per-row bias  (= -mean/std of the row's channel)
    x = x_ref[...].astype(jnp.float32)
    o_ref[...] = (x * scale_ref[...] + bias_ref[...]).astype(o_ref.dtype)


def _round_down(x, m):
    return (x // m) * m


def _vmem_capacity_bytes():
    try:
        info = pltpu.get_tpu_info()
        cap = int(getattr(info, "vmem_capacity_bytes", 0))
        if cap > 0:
            return cap
    except Exception:
        pass
    return 64 * 1024 * 1024  # conservative default (v7x per-core VMEM)


def _tile_sizes(rows, cols, itemsize, pipeline_budget):
    """Pick (tr, tc) so the total double-buffered pipeline footprint
    (x + out tiles plus the 128-lane-padded (tr,1) scale/bias tiles) stays
    within `pipeline_budget` bytes."""
    sublane = max(8, 32 // itemsize)      # 8 f32, 16 bf16/fp16, 32 int8/fp8
    vec_row_bytes = 4 * _LANE * 4          # scale+bias, f32, padded, 2 buffers

    # Lane tile: biggest lane-dense (multiple-of-128) tile that still leaves
    # room for one sublane group of rows.  Ragged tail handled by pl.cdiv.
    max_tc = (pipeline_budget // sublane - vec_row_bytes) // (4 * itemsize)
    max_tc = max(_LANE, _round_down(max_tc, _LANE))
    tc = cols if cols <= max_tc else max_tc

    # Row tile: let the budget, not a hard-coded cap, decide.
    max_tr = pipeline_budget // (4 * tc * itemsize + vec_row_bytes)
    max_tr = max(sublane, _round_down(max_tr, sublane))
    tr = rows if rows <= max_tr else max_tr

    # v7x has 2 TensorCores: make sure a 'parallel' axis has >= 2 steps when
    # there is enough data to be worth splitting.
    if pl.cdiv(rows, tr) * pl.cdiv(cols, tc) < 2 and tr * tc * itemsize >= (1 << 20):
        if rows >= 2 * sublane:
            tr = max(sublane, _round_down((rows + 1) // 2, sublane))
        elif cols >= 2 * _LANE:
            tc = max(_LANE, _round_down((cols + 1) // 2, _LANE))

    return tr, tc


@jax.jit
def normalization(img, mean, std):
    """img: (N, C, H, W); mean, std: (C,) -> (N, C, H, W).

    Matches PyTorch: (img - mean.view(-1,1,1)) / std.view(-1,1,1).
    """
    N, C, H, W = img.shape
    rows = N * C
    cols = H * W
    itemsize = img.dtype.itemsize

    # Keep scale/bias in float32 regardless of img dtype so low-precision
    # inputs don't compound rounding error; only the output is cast back.
    mean32 = jnp.asarray(mean, dtype=jnp.float32)
    std32 = jnp.asarray(std, dtype=jnp.float32)
    scale = 1.0 / std32                       # (C,)  std==0 -> inf, as PyTorch
    bias = -mean32 * scale                    # (C,)
    scale_rows = jnp.tile(scale, N).reshape(rows, 1)
    bias_rows = jnp.tile(bias, N).reshape(rows, 1)

    x2d = img.reshape(rows, cols)             # free view for contiguous NCHW

    vmem_cap = _vmem_capacity_bytes()
    # Total double-buffered footprint target: ~1/4 of VMEM keeps headroom on
    # every generation (v7x: 16 MiB of 64; v5e/v6e: capped at 24 MiB of 128).
    pipeline_budget = min(24 * 1024 * 1024, vmem_cap // 4)
    tr, tc = _tile_sizes(rows, cols, itemsize, pipeline_budget)

    grid = (pl.cdiv(rows, tr), pl.cdiv(cols, tc))

    footprint = 4 * tr * tc * itemsize + 4 * tr * _LANE * 4
    vmem_limit_bytes = int(min(max(32 << 20, footprint + (4 << 20)),
                               vmem_cap * 3 // 4))

    cost = pl.CostEstimate(
        flops=2 * rows * cols,
        transcendentals=0,
        bytes_accessed=2 * rows * cols * itemsize + 2 * rows * 4,
    )

    out2d = pl.pallas_call(
        _normalize_kernel,
        out_shape=jax.ShapeDtypeStruct((rows, cols), img.dtype),
        grid=grid,
        in_specs=[
            pl.BlockSpec((tr, tc), lambda i, j: (i, j)),
            pl.BlockSpec((tr, 1), lambda i, j: (i, 0)),
            pl.BlockSpec((tr, 1), lambda i, j: (i, 0)),
        ],
        out_specs=pl.BlockSpec((tr, tc), lambda i, j: (i, j)),
        compiler_params=pltpu.CompilerParams(
            dimension_semantics=("parallel", "parallel"),
            vmem_limit_bytes=vmem_limit_bytes,
        ),
        cost_estimate=cost,
    )(x2d, scale_rows, bias_rows)

    return out2d.reshape(N, C, H, W)


if __name__ == "__main__":
    key = jax.random.PRNGKey(0)
    N, C, H, W = 2, 3, 16, 16

    img = jax.random.uniform(key, (N, C, H, W), dtype=jnp.float32)

    # Deterministic "ImageNet-style" per-channel constants (module __init__ args).
    mean = jnp.array([0.485, 0.456, 0.406], dtype=jnp.float32)
    std = jnp.array([0.229, 0.224, 0.225], dtype=jnp.float32)

    out = normalization(img, mean, std)
    out = jax.block_until_ready(out)

    # Reference check against plain JAX broadcasting (same semantics as PyTorch).
    ref = (img - mean.reshape(-1, 1, 1)) / std.reshape(-1, 1, 1)
    assert out.shape == (N, C, H, W)
    assert jnp.allclose(out, ref, atol=1e-5, rtol=1e-5)

    print("KERNEL_OK")
</pallas_src>

<mosaic_0001>
module attributes {stable_mosaic.version = 11 : i64} {
  func.func @_normalize_kernel(%arg0: i32, %arg1: i32, %arg2: memref<6x256xf32, #tpu.memory_space<vmem>>, %arg3: memref<6x1xf32, #tpu.memory_space<vmem>>, %arg4: memref<6x1xf32, #tpu.memory_space<vmem>>, %arg5: memref<6x256xf32, #tpu.memory_space<vmem>>) attributes {dimension_semantics = [#tpu.dimension_semantics<parallel>, #tpu.dimension_semantics<parallel>], iteration_bounds = array<i64: 1, 1>, scalar_prefetch = 0 : i64, scratch_operands = 0 : i64, tpu.core_type = #tpu.core_type<tc>, window_params = [{transform_indices = @transform_0, window_bounds = array<i64: 6, 256>}, {transform_indices = @transform_1, window_bounds = array<i64: 6, 1>}, {transform_indices = @transform_2, window_bounds = array<i64: 6, 1>}, {transform_indices = @transform_3, window_bounds = array<i64: 6, 256>}]} {
    %c0 = arith.constant 0 : index
    %c0_0 = arith.constant 0 : index
    %0 = vector.load %arg2[%c0, %c0_0] : memref<6x256xf32, #tpu.memory_space<vmem>>, vector<6x256xf32>
    %c0_1 = arith.constant 0 : index
    %c0_2 = arith.constant 0 : index
    %1 = vector.load %arg3[%c0_1, %c0_2] : memref<6x1xf32, #tpu.memory_space<vmem>>, vector<6x1xf32>
    %2 = vector.broadcast %1 : vector<6x1xf32> to vector<6x256xf32>
    %3 = arith.mulf %0, %2 : vector<6x256xf32>
    %c0_3 = arith.constant 0 : index
    %c0_4 = arith.constant 0 : index
    %4 = vector.load %arg4[%c0_3, %c0_4] : memref<6x1xf32, #tpu.memory_space<vmem>>, vector<6x1xf32>
    %5 = vector.broadcast %4 : vector<6x1xf32> to vector<6x256xf32>
    %6 = arith.addf %3, %5 : vector<6x256xf32>
    %c0_5 = arith.constant 0 : index
    %c0_6 = arith.constant 0 : index
    %7 = vector.load %arg5[%c0_5, %c0_6] : memref<6x256xf32, #tpu.memory_space<vmem>>, vector<6x256xf32>
    tpu.vector_store %arg5[%c0_5, %c0_6], %6 {strides = array<i32>} : memref<6x256xf32, #tpu.memory_space<vmem>>, vector<6x256xf32>,
    return
  }
  func.func @transform_0(%arg0: i32, %arg1: i32) -> (i32, i32) {
    %c0_i32 = arith.constant 0 : i32
    return %arg0, %arg1 : i32, i32
  }
  func.func @transform_1(%arg0: i32, %arg1: i32) -> (i32, i32) {
    %c0_i32 = arith.constant 0 : i32
    %c0_i32_0 = arith.constant 0 : i32
    return %arg0, %c0_i32 : i32, i32
  }
  func.func @transform_2(%arg0: i32, %arg1: i32) -> (i32, i32) {
    %c0_i32 = arith.constant 0 : i32
    %c0_i32_0 = arith.constant 0 : i32
    return %arg0, %c0_i32 : i32, i32
  }
  func.func @transform_3(%arg0: i32, %arg1: i32) -> (i32, i32) {
    %c0_i32 = arith.constant 0 : i32
    return %arg0, %arg1 : i32, i32
  }
}

</mosaic_0001>

<llo_original>
// kernel: tile.0
$region0: #{tile.0}
  %s0 = inlined_call_operand.vmem [shape: f32[2,3], index: 0, kind: input, shape index: {}]
  %s1 = inlined_call_operand.vmem [shape: f32[6,1], index: 1, kind: output, shape index: {}]
  $region1: #{tile.0} parent=0
    #allocation0 [shape = 'u8[4096]{0}', space=vmem, size = 0x1000, scoped, tag = 'scoped mem for input reshape']
    %s3 = sshll.u32 1, 2
    %s4 = ssub.s32 %s3, 1
    %v5 = vld [vmem:[%s0] sm:%s4]
    %6 = vst [vmem:[#allocation0] sm:%s4] %v5
    %v7 = vld [vmem:[#allocation0] sm:$0x3]
    %vm8 = vcmask 7168
    %9 = vst.msk [vmem:[%s1] ss:$3 sm:$0x3] %vm8, %v7
    %v10 = vld [vmem:[#allocation0] sm:$0x3]
    %11 = vrot.lane.b32.xlu0 %v10, 127
    %v12 = vpop.permute.xlu0 %11
    %vm13 = vcmask 7168
    %s14 = scalar_lea.vmem %s1, 1
    %15 = vst.msk [vmem:[%s14] ss:$3 sm:$0x3] %vm13, %v12
    %v16 = vld [vmem:[#allocation0] sm:$0x3]
    %17 = vrot.lane.b32.xlu0 %v16, 126
    %v18 = vpop.permute.xlu0 %17
    %vm19 = vcmask 7168
    %s20 = scalar_lea.vmem %s1, 2
    %21 = vst.msk [vmem:[%s20] ss:$3 sm:$0x3] %vm19, %v18

// kernel: tile.18
$region0: #{tile.18}
  #allocation0 [shape = 's32[1]{0}', space=sflag, size = 0x4, scoped, tag = 'scoped memory for tile.18']
  %s0 = inlined_call_operand.vmem [shape: f32[3], index: 0, kind: input, shape index: {}]
  %s1 = inlined_call_operand.vmem [shape: f32[2,3], index: 1, kind: output, shape index: {}]
  // Predicated region
  $region2: #{tile.18} parent=0 // pred_check
    _
  $region3: #{tile.18} parent=0 // pred_check_branch
    %3 = sbr.rel (0) target = $region5
  $region4: #{tile.18} parent=0 // pred_region
    _
  $region5: #{tile.18} parent=0 // pred_fallthru
    _
  %v4 = vld [vmem:[%s0] ss:$0 sm:$0xff]
  %5 = vst [vmem:[%s1] sm:$0x3] %v4

// kernel: normalization.1
$region0: #{normalization.1}
  #allocation0 [shape = 'u32[]', space=smem, size = 0x4, offset = 0x4, fixed_abs, tag = 'smem constant byte address 0x4 - core index']
  #allocation1 [shape = 'u32[144,128]{1,0:T(1,128)}', space=vmem, size = 0x12000, scoped, tag = 'internal scratch']
  %s0 = inlined_call_operand.vmem [shape: f32[6,256], index: 0, kind: input, shape index: {}]
  %s1 = inlined_call_operand.vmem [shape: f32[6,1], index: 1, kind: input, shape index: {}]
  %s2 = inlined_call_operand.vmem [shape: f32[6,1], index: 2, kind: input, shape index: {}]
  %s3 = inlined_call_operand.vmem [shape: f32[6,256], index: 3, kind: output, shape index: {}]
  %s4 = sld [smem:[#allocation0]]
  $region22: #{normalization.1} parent=0
    _
  %s6 = ssub.s32 1, %s4
  %s7 = scalar_select 0, %s6, %s4
  // Predicated region
  $region2: #{normalization.1} parent=0 // pred_check
    _
  $region3: #{normalization.1} parent=0 // pred_check_branch
    %9 = sbr.rel (0) target = $region5
  $region4: #{normalization.1} parent=0 // pred_region
    _
  $region5: #{normalization.1} parent=0 // pred_fallthru
    _
  // Predicated region
  $region6: #{normalization.1} parent=0 // pred_check
    _
  $region7: #{normalization.1} parent=0 // pred_check_branch
    %11 = sbr.rel (0) target = $region9
  $region8: #{normalization.1} parent=0 // pred_region
    _
  $region9: #{normalization.1} parent=0 // pred_fallthru
    _
  // Predicated region
  $region10: #{normalization.1} parent=0 // pred_check
    _
  $region11: #{normalization.1} parent=0 // pred_check_branch
    %13 = sbr.rel (0) target = $region13
  $region12: #{normalization.1} parent=0 // pred_region
    _
  $region13: #{normalization.1} parent=0 // pred_fallthru
    _
  %v14 = vld [vmem:[%s0] sm:$0x3f]
  %v15 = vld [vmem:[%s0 + $0x8] sm:$0x3f]
  %v16 = vld [vmem:[%s1] sm:$0x3f]
  %18 = vset.pattern.permute.xlu0 0
  %19 = vperm.xlu0 %18, %v16
  %v20 = vpop.permute.xlu0 %19
  %v22 = vmul.f32 %v14, %v20
  %v23 = vmul.f32 %v15, %v20
  %v24 = vld [vmem:[%s2] sm:$0x3f]
  %26 = vset.pattern.permute.xlu0 0
  %27 = vperm.xlu0 %26, %v24
  %v28 = vpop.permute.xlu0 %27
  %v30 = vadd.f32 %v22, %v28
  %v31 = vadd.f32 %v23, %v28
  %32 = vst [vmem:[%s3] sm:$0x3f] %v30
  %33 = vst [vmem:[%s3 + $0x8] sm:$0x3f] %v31
  // Predicated region
  $region14: #{normalization.1} parent=0 // pred_check
    _
  $region15: #{normalization.1} parent=0 // pred_check_branch
    %35 = sbr.rel (0) target = $region17
  $region16: #{normalization.1} parent=0 // pred_region
    _
  $region17: #{normalization.1} parent=0 // pred_fallthru
    _
  // Predicated region
  $region18: #{normalization.1} parent=0 // pred_check
    _
  $region19: #{normalization.1} parent=0 // pred_check_branch
    %37 = sbr.rel (0) target = $region21
  $region20: #{normalization.1} parent=0 // pred_region
    _
  $region21: #{normalization.1} parent=0 // pred_fallthru
    _

</llo_original>
